<compile_context>
chip_gen: v7x
topology: tpu7x:2x2x1
jax: 0.10.0
libtpu: 0.0.40
codegen_flags: <defaults>
</compile_context>

<pallas_src>
import jax
import jax.numpy as jnp
from jax.experimental import pallas as pl
from jax.experimental.pallas import tpu as pltpu

_TM_MAX = 8192  # rows per tile: multiple of 512, ~1 MiB f32 input tile -> fits every gen


def _round_up(x, m):
    return (x + m - 1) // m * m


def _linear_kernel(x_ref, w_ref, b_ref, o_ref):
    # (TM, K) @ (K, N) on the MXU with f32 accumulation, then bias add.
    acc = jnp.dot(x_ref[...], w_ref[...], preferred_element_type=jnp.float32)
    o_ref[...] = (acc + b_ref[...]).astype(o_ref.dtype)


def fully_connected(x, weight, bias):
    """Pallas implementation of nn.Linear applied to the last dim of x.

    x:      (..., hidden)
    weight: (hidden, out)   (note: torch stores (out, hidden); we pass W^T)
    bias:   (out,)
    """
    orig_shape = x.shape
    hidden = orig_shape[-1]
    out_ch = weight.shape[1]
    x2d = x.reshape(-1, hidden)
    m = x2d.shape[0]
    b2d = bias.reshape(1, out_ch)

    # Sublane-align M: the block's second-to-last dim must be a multiple of 8
    # unless it equals the full dim. For the common case (m % 8 == 0) this is a no-op.
    m_pad = _round_up(m, 8)
    if m_pad != m:
        x2d = jnp.pad(x2d, ((0, m_pad - m), (0, 0)))

    tm = min(_TM_MAX, m_pad)
    grid = (pl.cdiv(m_pad, tm),)  # ragged last block (if any) is masked by Pallas

    itemsize = jnp.dtype(x.dtype).itemsize
    cost = pl.CostEstimate(
        flops=2 * m_pad * hidden * out_ch,
        transcendentals=0,
        bytes_accessed=(m_pad * hidden + hidden * out_ch + out_ch + m_pad * out_ch)
        * itemsize,
    )

    out = pl.pallas_call(
        _linear_kernel,
        out_shape=jax.ShapeDtypeStruct((m_pad, out_ch), x.dtype),
        grid_spec=pltpu.PrefetchScalarGridSpec(
            num_scalar_prefetch=0,
            grid=grid,
            in_specs=[
                # token tiles stream through VMEM (double-buffered by Pallas)
                pl.BlockSpec((tm, hidden), lambda i: (i, 0)),
                # weight & bias stay VMEM-resident (same block every step)
                pl.BlockSpec((hidden, out_ch), lambda i: (0, 0)),
                pl.BlockSpec((1, out_ch), lambda i: (0, 0)),
            ],
            out_specs=pl.BlockSpec((tm, out_ch), lambda i: (i, 0)),
        ),
        compiler_params=pltpu.CompilerParams(
            # parallel: lets v7x shard the M loop over its 2 TensorCores;
            # neutral on single-core v5e/v6e.
            dimension_semantics=("parallel",),
        ),
        cost_estimate=cost,
    )(x2d, weight, b2d)

    out = out[:m]
    return out.reshape(*orig_shape[:-1], out_ch)


if __name__ == "__main__":
    hidden_channels = 32
    out_channels = 1
    batch, seq = 2, 8  # small shapes; Linear acts on the last (hidden) dim

    key = jax.random.PRNGKey(0)
    kx, kw, kb = jax.random.split(key, 3)

    # Deterministic parameter init (same shapes as nn.Linear(hidden, out)):
    # torch stores weight as (out, hidden); we keep its transpose (hidden, out).
    bound = 1.0 / (hidden_channels ** 0.5)
    weight = jax.random.uniform(
        kw, (hidden_channels, out_channels), jnp.float32, -bound, bound
    )
    bias = jax.random.uniform(kb, (out_channels,), jnp.float32, -bound, bound)

    x = jax.random.normal(kx, (batch, seq, hidden_channels), jnp.float32)

    y = fully_connected(x, weight, bias)
    y = jax.block_until_ready(y)

    # Reference check in plain JAX (same math as torch's F.linear).
    y_ref = x @ weight + bias
    assert y.shape == (batch, seq, out_channels)
    assert jnp.allclose(y, y_ref, atol=1e-5, rtol=1e-5)

    # Extra check: leading-dim product not a multiple of 8 exercises the padding path.
    x_odd = jax.random.normal(kx, (3, 5, hidden_channels), jnp.float32)
    y_odd = jax.block_until_ready(fully_connected(x_odd, weight, bias))
    assert jnp.allclose(y_odd, x_odd @ weight + bias, atol=1e-5, rtol=1e-5)

    print("KERNEL_OK")
</pallas_src>

<mosaic_0001>
module attributes {stable_mosaic.version = 11 : i64} {
  func.func @_linear_kernel(%arg0: i32, %arg1: memref<16x32xf32, #tpu.memory_space<vmem>>, %arg2: memref<32x1xf32, #tpu.memory_space<vmem>>, %arg3: memref<1x1xf32, #tpu.memory_space<vmem>>, %arg4: memref<16x1xf32, #tpu.memory_space<vmem>>) attributes {dimension_semantics = [#tpu.dimension_semantics<parallel>], iteration_bounds = array<i64: 1>, scalar_prefetch = 0 : i64, scratch_operands = 0 : i64, tpu.core_type = #tpu.core_type<tc>, window_params = [{transform_indices = @transform_0, window_bounds = array<i64: 16, 32>}, {pipeline_mode = #tpu.pipeline_mode<synchronous>, transform_indices = @transform_1, window_bounds = array<i64: 32, 1>}, {pipeline_mode = #tpu.pipeline_mode<synchronous>, transform_indices = @transform_2, window_bounds = array<i64: 1, 1>}, {transform_indices = @transform_3, window_bounds = array<i64: 16, 1>}]} {
    %c0 = arith.constant 0 : index
    %c0_0 = arith.constant 0 : index
    %0 = vector.load %arg1[%c0, %c0_0] : memref<16x32xf32, #tpu.memory_space<vmem>>, vector<16x32xf32>
    %c0_1 = arith.constant 0 : index
    %c0_2 = arith.constant 0 : index
    %1 = vector.load %arg2[%c0_1, %c0_2] : memref<32x1xf32, #tpu.memory_space<vmem>>, vector<32x1xf32>
    %cst = arith.constant dense<0.000000e+00> : vector<16x1xf32>
    %2 = tpu.matmul %0, %1, %cst {dimension_numbers = #tpu.dot_dimension_numbers<[1], [0], [0], [1], [0, 0, 1, 1], [], []>} : vector<16x32xf32>, vector<32x1xf32>, vector<16x1xf32> -> vector<16x1xf32>
    %c0_3 = arith.constant 0 : index
    %c0_4 = arith.constant 0 : index
    %3 = vector.load %arg3[%c0_3, %c0_4] : memref<1x1xf32, #tpu.memory_space<vmem>>, vector<1x1xf32>
    %4 = vector.broadcast %3 : vector<1x1xf32> to vector<16x1xf32>
    %5 = arith.addf %2, %4 : vector<16x1xf32>
    %c0_5 = arith.constant 0 : index
    %c0_6 = arith.constant 0 : index
    %6 = vector.load %arg4[%c0_5, %c0_6] : memref<16x1xf32, #tpu.memory_space<vmem>>, vector<16x1xf32>
    tpu.vector_store %arg4[%c0_5, %c0_6], %5 {strides = array<i32>} : memref<16x1xf32, #tpu.memory_space<vmem>>, vector<16x1xf32>,
    return
  }
  func.func @transform_0(%arg0: i32) -> (i32, i32) {
    %c0_i32 = arith.constant 0 : i32
    %c0_i32_0 = arith.constant 0 : i32
    return %arg0, %c0_i32 : i32, i32
  }
  func.func @transform_1(%arg0: i32) -> (i32, i32) {
    %c0_i32 = arith.constant 0 : i32
    %c0_i32_0 = arith.constant 0 : i32
    %c0_i32_1 = arith.constant 0 : i32
    return %c0_i32, %c0_i32_0 : i32, i32
  }
  func.func @transform_2(%arg0: i32) -> (i32, i32) {
    %c0_i32 = arith.constant 0 : i32
    %c0_i32_0 = arith.constant 0 : i32
    %c0_i32_1 = arith.constant 0 : i32
    return %c0_i32, %c0_i32_0 : i32, i32
  }
  func.func @transform_3(%arg0: i32) -> (i32, i32) {
    %c0_i32 = arith.constant 0 : i32
    %c0_i32_0 = arith.constant 0 : i32
    return %arg0, %c0_i32 : i32, i32
  }
}

</mosaic_0001>

<llo_original>
// kernel: tpu_custom_call.1
$region0: #{tpu_custom_call.1}
  #allocation0 [shape = 'u32[]', space=smem, size = 0x4, offset = 0x4, fixed_abs, tag = 'smem constant byte address 0x4 - core index']
  #allocation1 [shape = 'u32[144,128]{1,0:T(1,128)}', space=vmem, size = 0x12000, scoped, tag = 'internal scratch']
  #allocation2 [shape = 'f32[1,1]{1,0:T(1,128)S(1)}', space=vmem, size = 0x200, scoped, tag = 'scoped memory for tpu_custom_call.1']
  %s0 = inlined_call_operand.vmem [shape: f32[16,32], index: 0, kind: input, shape index: {}]
  %s1 = inlined_call_operand.vmem [shape: f32[32,1], index: 1, kind: input, shape index: {}]
  %s2 = inlined_call_operand.<no memory space> [shape: f32[1,1], index: 2, kind: input, shape index: {}]
  %s3 = inlined_call_operand.vmem [shape: f32[16,1], index: 3, kind: output, shape index: {}]
  %s4 = sld [smem:[#allocation0]]
  $region22: #{tpu_custom_call.1} parent=0
    _
  %s6 = ssub.s32 1, %s4
  %s7 = scalar_select 0, %s6, %s4
  %v8 = vstv %s2
  %9 = vst [vmem:[#allocation2] sm:$0x1] %v8
  // Predicated region
  $region2: #{tpu_custom_call.1} parent=0 // pred_check
    _
  $region3: #{tpu_custom_call.1} parent=0 // pred_check_branch
    %11 = sbr.rel (0) target = $region5
  $region4: #{tpu_custom_call.1} parent=0 // pred_region
    _
  $region5: #{tpu_custom_call.1} parent=0 // pred_fallthru
    _
  // Predicated region
  $region6: #{tpu_custom_call.1} parent=0 // pred_check
    _
  $region7: #{tpu_custom_call.1} parent=0 // pred_check_branch
    %13 = sbr.rel (0) target = $region9
  $region8: #{tpu_custom_call.1} parent=0 // pred_region
    _
  $region9: #{tpu_custom_call.1} parent=0 // pred_fallthru
    _
  // Predicated region
  $region10: #{tpu_custom_call.1} parent=0 // pred_check
    _
  $region11: #{tpu_custom_call.1} parent=0 // pred_check_branch
    %15 = sbr.rel (0) target = $region13
  $region12: #{tpu_custom_call.1} parent=0 // pred_region
    _
  $region13: #{tpu_custom_call.1} parent=0 // pred_fallthru
    _
  %v16 = vld [vmem:[%s0] sm:$0xff]
  %v17 = vld [vmem:[%s0 + $0x8] sm:$0xff]
  %v18 = vld [vmem:[%s1] sm:$0xff]
  %v19 = vld [vmem:[%s1 + $0x8] sm:$0xff]
  %v20 = vld [vmem:[%s1 + $0x10] sm:$0xff]
  %v21 = vld [vmem:[%s1 + $0x18] sm:$0xff]
  %v22 = vld [vmem:[#allocation2] sm:$0x1]
  %v24 = vlaneseq
  %v25 = vshrl.u32 %v24, 7
  %v26 = vsub.s32 0, %v25
  %v27 = vrot.slane %v22, %v26
  %vm29 = vcmask 261120
  %v31 = vsel %vm29, %v16, 0
  %v34 = vsel %vm29, %v17, 0
  %36 = vmatprep.subr.mxu0 0.0
  %37 = vmatpush1.msra.mxu0 %v18
  %38 = vmatprep.subr.mxu0 0.0
  %39 = vmatpush1.msra.mxu0 %v19
  %40 = vmatprep.subr.mxu0 0.0
  %41 = vmatpush1.msra.mxu0 %v20
  %42 = vmatprep.subr.mxu0 0.0
  %43 = vmatpush1.msra.mxu0 %v21
  %44 = vmatprep.subr.mxu0 0.0
  %45 = vmatpush1.msra.mxu0 0.0
  %46 = vmatprep.subr.mxu0 0.0
  %47 = vmatpush1.msra.mxu0 0.0
  %48 = vmatprep.subr.mxu0 0.0
  %49 = vmatpush1.msra.mxu0 0.0
  %50 = vmatprep.subr.mxu0 0.0
  %51 = vmatpush1.msra.mxu0 0.0
  %52 = vmatprep.subr.mxu0 0.0
  %53 = vmatpush1.msra.mxu0 0.0
  %54 = vmatprep.subr.mxu0 0.0
  %55 = vmatpush1.msra.mxu0 0.0
  %56 = vmatprep.subr.mxu0 0.0
  %57 = vmatpush1.msra.mxu0 0.0
  %58 = vmatprep.subr.mxu0 0.0
  %59 = vmatpush1.msra.mxu0 0.0
  %60 = vmatprep.subr.mxu0 0.0
  %61 = vmatpush1.msra.mxu0 0.0
  %62 = vmatprep.subr.mxu0 0.0
  %63 = vmatpush1.msra.mxu0 0.0
  %64 = vmatprep.subr.mxu0 0.0
  %65 = vmatpush1.msra.mxu0 0.0
  %66 = vmatprep.subr.mxu0 0.0
  %67 = vmatpush1.msra.mxu0 0.0
  %68 = vmatprep.subr.mxu0 0.0
  %69 = vmatpush1.msra.mxu0 0.0
  %70 = vmatprep.subr.mxu0 0.0
  %71 = vmatpush1.msra.mxu0 0.0
  %72 = vmatprep.subr.mxu0 0.0
  %73 = vmatpush1.msra.mxu0 0.0
  %74 = vmatprep.subr.mxu0 0.0
  %75 = vmatpush1.msra.mxu0 0.0
  %76 = vmatprep.subr.mxu0 0.0
  %77 = vmatpush1.msra.mxu0 0.0
  %78 = vmatprep.subr.mxu0 0.0
  %79 = vmatpush1.msra.mxu0 0.0
  %80 = vmatprep.subr.mxu0 0.0
  %81 = vmatpush1.msra.mxu0 0.0
  %82 = vmatprep.subr.mxu0 0.0
  %83 = vmatpush1.msra.mxu0 0.0
  %84 = vmatprep.subr.mxu0 0.0
  %85 = vmatpush1.msra.mxu0 0.0
  %86 = vmatprep.subr.mxu0 0.0
  %87 = vmatpush1.msra.mxu0 0.0
  %88 = vmatprep.subr.mxu0 0.0
  %89 = vmatpush1.msra.mxu0 0.0
  %90 = vmatprep.subr.mxu0 0.0
  %91 = vmatpush1.msra.mxu0 0.0
  %92 = vmatprep.subr.mxu0 0.0
  %93 = vmatpush1.msra.mxu0 0.0
  %94 = vmatprep.subr.mxu0 0.0
  %95 = vmatpush1.msra.mxu0 0.0
  %96 = vmatprep.subr.mxu0 0.0
  %97 = vmatpush1.msra.mxu0 0.0
  %98 = vmatprep.subr.mxu0 0.0
  %99 = vmatpush1.msra.mxu0 0.0
  %100 = vmatprep.mubr.f32.mxu0 0.0
  %101 = vmatmul.mubr.f32.gmra.mrb[0].mxu0 %v31
  %v102 = vpop.f32.mrb[0].mxu0
  %v103 = vadd.f32 %v27, %v102
  %v104 = vpop.f32.mrb[0].mxu0
  %105 = vmatprep.mubr.f32.mxu0 0.0
  %106 = vmatmul.mubr.f32.gmra.mrb[0].mxu0 %v34
  %v107 = vpop.f32.mrb[0].mxu0
  %v108 = vadd.f32 %v27, %v107
  %v109 = vpop.f32.mrb[0].mxu0
  %110 = vdwg.mxu0
  %vm111 = vcmask 7168
  %112 = vst.msk [vmem:[%s3] sm:$0xff] %vm111, %v103
  %113 = vst.msk [vmem:[%s3 + $0x8] sm:$0xff] %vm111, %v108
  // Predicated region
  $region14: #{tpu_custom_call.1} parent=0 // pred_check
    _
  $region15: #{tpu_custom_call.1} parent=0 // pred_check_branch
    %115 = sbr.rel (0) target = $region17
  $region16: #{tpu_custom_call.1} parent=0 // pred_region
    _
  $region17: #{tpu_custom_call.1} parent=0 // pred_fallthru
    _
  // Predicated region
  $region18: #{tpu_custom_call.1} parent=0 // pred_check
    _
  $region19: #{tpu_custom_call.1} parent=0 // pred_check_branch
    %117 = sbr.rel (0) target = $region21
  $region20: #{tpu_custom_call.1} parent=0 // pred_region
    _
  $region21: #{tpu_custom_call.1} parent=0 // pred_fallthru
    _

</llo_original>
